<compile_context>
chip_gen: v5e
topology: v5e:2x2
jax: 0.10.0
libtpu: 0.0.40
codegen_flags: <defaults>
</compile_context>

<pallas_src>
import jax
import jax.numpy as jnp
from jax.experimental import pallas as pl
from jax.experimental.pallas import tpu as pltpu

# ---- model / problem configuration ----
MAIN_DIM   = 5
VEH_DIM    = 7           # danger_std constant in the reference has 7 entries
VEH_COUNT  = 6
HIDDEN     = 32
ACTION_DIM = 3
B          = 4
STATE_DIM  = MAIN_DIM + VEH_COUNT * VEH_DIM      # 47

# packed-activation lane layout: [veh(0:42) | main(42:47) | prob(47:50) | inv(50:53) | pad]
VEH_LANES  = VEH_COUNT * VEH_DIM                  # 42
MAIN_OFF   = VEH_LANES                            # 42
PROB_OFF   = MAIN_OFF + MAIN_DIM                  # 47
INV_OFF    = PROB_OFF + ACTION_DIM                # 50
ACT_WIDTH  = 64

SLAB_ROWS, SLAB_COLS = 128, 128


def ppo_attention_kernel(act_ref, w_ref, out_ref):
    act = act_ref[...]                                             # [tb, 64]

    veh  = act[:, 0:VEH_LANES]                                     # [tb, 42] lane-dense
    prob = act[:, PROB_OFF:PROB_OFF + ACTION_DIM]                  # [tb, 3]
    inv  = act[:, INV_OFF:INV_OFF + ACTION_DIM]                    # [tb, 3]

    # ---- lane-change gate: sigmoid(2 * sum|inverse - prob|) ----
    diff = jnp.sum(jnp.abs(inv - prob), axis=1, keepdims=True)     # [tb, 1]
    gate = 1.0 / (1.0 + jnp.exp(-2.0 * diff))                      # exact sigmoid

    # ---- vehicle attention: softmax_v( -||veh_v - danger|| ) ----
    # dist^2 = sum_d veh^2 + 10*(veh_0 + veh_2) + 50  ==  (veh*(veh + C)) @ G + 50
    crow  = w_ref[112:113, 0:VEH_LANES]                            # [1, 42] C_row constant
    G     = w_ref[64:106, 64:70]                                   # [42, 6] group-sum 0/1
    dist2 = jnp.dot(veh * (veh + crow), G,
                    preferred_element_type=jnp.float32) + 50.0     # [tb, 6]
    neg   = -jnp.sqrt(jnp.maximum(dist2, 0.0))
    m     = jnp.max(neg, axis=1, keepdims=True)
    e     = jnp.exp(neg - m)
    wsm   = e / jnp.sum(e, axis=1, keepdims=True)                  # [tb, 6] (sums to 1)

    # ---- per-lane scale: [w_exp(42) | 1(5) | gate(3) | 0(pad)] via one K=8 matmul ----
    s8    = jnp.concatenate([wsm, gate, jnp.ones_like(gate)], axis=1)   # [tb, 8]
    E8    = w_ref[64:72, 0:ACT_WIDTH]                              # [8, 64] expansion 0/1
    scale = jnp.dot(s8, E8, preferred_element_type=jnp.float32)    # [tb, 64]

    # ---- fused embed matmul (main-embed | weighted-veh-embed | prob->fc contribution) ----
    u    = act * scale                                             # [tb, 64]
    Wbig = w_ref[0:64, 0:96]                                       # [64, 96]
    emb  = jnp.dot(u, Wbig, preferred_element_type=jnp.float32)    # [tb, 96]

    # ---- fc_final + ReLU (bm, bv folded into bf') ----
    Wf  = w_ref[0:64, 96:128]                                      # [64, 32]
    bfp = w_ref[113:114, 0:HIDDEN]                                 # [1, 32]
    h   = jnp.maximum(
        jnp.dot(emb[:, 0:2 * HIDDEN], Wf, preferred_element_type=jnp.float32)
        + emb[:, 2 * HIDDEN:3 * HIDDEN] + bfp, 0.0)                # [tb, 32]

    # ---- fused policy/value heads ----
    Whd = w_ref[72:104, 0:ACTION_DIM + 1]                          # [32, 4]
    bh  = w_ref[114:115, 0:ACTION_DIM + 1]                         # [1, 4]
    out_ref[...] = jnp.dot(h, Whd, preferred_element_type=jnp.float32) + bh


def pack_params(params):
    """One-time layout plumbing: pack all weights/constants into a [128,128] slab."""
    wm, bm   = params["wm"], params["bm"]        # [5,32],  [1,32]
    wv, bv   = params["wv"], params["bv"]        # [7,32],  [1,32]
    wf, bf   = params["wf"], params["bf"]        # [67,32], [1,32] rows: [main|prob|veh]
    wp, bp   = params["wp"], params["bp"]        # [32,3],  [1,3]
    wvh, bvh = params["wvh"], params["bvh"]      # [32,1],  [1,1]

    wf_main = wf[0:HIDDEN]                              # [32, 32]
    wf_prob = wf[HIDDEN:HIDDEN + ACTION_DIM]            # [3, 32]
    wf_veh  = wf[HIDDEN + ACTION_DIM:]                  # [32, 32]

    slab = jnp.zeros((SLAB_ROWS, SLAB_COLS), jnp.float32)

    # W_big [64,96]: rows follow the packed-activation lane layout.
    slab = slab.at[0:VEH_LANES, HIDDEN:2 * HIDDEN].set(jnp.tile(wv, (VEH_COUNT, 1)))
    slab = slab.at[MAIN_OFF:MAIN_OFF + MAIN_DIM, 0:HIDDEN].set(wm)
    slab = slab.at[PROB_OFF:PROB_OFF + ACTION_DIM, 2 * HIDDEN:3 * HIDDEN].set(wf_prob)

    # Wf [64,32] at cols 96:128: rows 0:32 = wf_main, rows 32:64 = wf_veh.
    slab = slab.at[0:HIDDEN, 96:128].set(wf_main)
    slab = slab.at[HIDDEN:2 * HIDDEN, 96:128].set(wf_veh)

    # E8 [8,64] at rows 64:72, cols 0:64 (scale-expansion matrix).
    e8 = jnp.zeros((8, ACT_WIDTH), jnp.float32)
    for v in range(VEH_COUNT):
        e8 = e8.at[v, VEH_DIM * v:VEH_DIM * (v + 1)].set(1.0)      # weight -> its 7 veh lanes
    e8 = e8.at[6, PROB_OFF:PROB_OFF + ACTION_DIM].set(1.0)         # gate   -> prob lanes
    e8 = e8.at[7, MAIN_OFF:MAIN_OFF + MAIN_DIM].set(1.0)           # ones   -> main lanes
    slab = slab.at[64:72, 0:ACT_WIDTH].set(e8)

    # G [42,6] group-sum indicator at rows 64:106, cols 64:70.
    g = jnp.zeros((VEH_LANES, VEH_COUNT), jnp.float32)
    for v in range(VEH_COUNT):
        g = g.at[VEH_DIM * v:VEH_DIM * (v + 1), v].set(1.0)
    slab = slab.at[64:106, 64:70].set(g)

    # Fused heads [32,4] at rows 72:104, cols 0:4.
    slab = slab.at[72:104, 0:ACTION_DIM].set(wp)
    slab = slab.at[72:104, ACTION_DIM:ACTION_DIM + 1].set(wvh)

    # Constant rows.
    c_row = jnp.tile(jnp.array([10.0, 0.0, 10.0, 0.0, 0.0, 0.0, 0.0], jnp.float32),
                     VEH_COUNT)                                    # -2*danger per lane
    slab = slab.at[112, 0:VEH_LANES].set(c_row)
    bfp = bf + bm @ wf_main + bv @ wf_veh                          # fold bm, bv (sum_w == 1)
    slab = slab.at[113:114, 0:HIDDEN].set(bfp)
    slab = slab.at[114:115, 0:ACTION_DIM].set(bp)
    slab = slab.at[114:115, ACTION_DIM:ACTION_DIM + 1].set(bvh)
    return slab


def ppo_forward(x, action, prob, params, slab=None):
    """Wrapper: cheap XLA packing, hot path in the Pallas kernel."""
    b = x.shape[0]
    onehot = jax.nn.one_hot(action, ACTION_DIM, dtype=jnp.float32)
    act_pack = jnp.concatenate(
        [x[:, MAIN_DIM:],                       # veh lanes 0:42
         x[:, :MAIN_DIM],                       # main lanes 42:47
         prob,                                  # prob lanes 47:50
         1.0 - onehot,                          # inverse lanes 50:53
         jnp.zeros((b, ACT_WIDTH - INV_OFF - ACTION_DIM), jnp.float32)],
        axis=1)                                                    # [b, 64]

    if slab is None:
        slab = pack_params(params)

    # Single grid step up to 512 rows (amortizes per-step overhead on single-TC chips);
    # beyond that, 512-row "parallel" blocks.
    tb   = b if b <= 512 else 512
    grid = (pl.cdiv(b, tb),)

    out = pl.pallas_call(
        ppo_attention_kernel,
        out_shape=jax.ShapeDtypeStruct((b, ACTION_DIM + 1), jnp.float32),
        grid_spec=pltpu.PrefetchScalarGridSpec(
            num_scalar_prefetch=0,
            grid=grid,
            in_specs=[
                pl.BlockSpec((tb, ACT_WIDTH),         lambda i: (i, 0)),
                pl.BlockSpec((SLAB_ROWS, SLAB_COLS),  lambda i: (0, 0)),
            ],
            out_specs=pl.BlockSpec((tb, ACTION_DIM + 1), lambda i: (i, 0)),
        ),
        compiler_params=pltpu.CompilerParams(dimension_semantics=("parallel",)),
    )(act_pack, slab)

    return out[:, :ACTION_DIM], out[:, ACTION_DIM:]


def ppo_forward_ref(x, action, prob, params):
    """Pure-JAX reference mirroring the PyTorch forward (attention branch)."""
    b = x.shape[0]
    main_feat = x[:, :MAIN_DIM]
    veh_feat  = x[:, MAIN_DIM:].reshape(b, VEH_COUNT, VEH_DIM)
    main_embed = main_feat @ params["wm"] + params["bm"]
    onehot  = jax.nn.one_hot(action, 3, dtype=jnp.float32)
    diff    = jnp.sum(jnp.abs((1.0 - onehot) - prob), axis=1, keepdims=True)
    gate    = jax.nn.sigmoid(2.0 * diff)
    weighted_prob = gate * prob
    danger = jnp.array([-5.0, 0.0, -5.0, 0.0, 0.0, 0.0, 0.0], dtype=jnp.float32)
    dist   = jnp.linalg.norm(veh_feat - danger, axis=-1)
    weights = jax.nn.softmax(-dist, axis=1)
    veh_embeds   = veh_feat @ params["wv"] + params["bv"]
    weighted_veh = jnp.sum(weights[:, :, None] * veh_embeds, axis=1)
    final_input  = jnp.concatenate([main_embed, weighted_prob, weighted_veh], axis=1)
    h = jax.nn.relu(final_input @ params["wf"] + params["bf"])
    return h @ params["wp"] + params["bp"], h @ params["wvh"] + params["bvh"]


if __name__ == "__main__":
    key = jax.random.PRNGKey(0)
    keys = jax.random.split(key, 12)

    def linear_params(k, fan_in, fan_out):
        kw, kb = jax.random.split(k)
        w = jax.random.normal(kw, (fan_in, fan_out), dtype=jnp.float32) * 0.1
        bias = jax.random.normal(kb, (1, fan_out), dtype=jnp.float32) * 0.1
        return w, bias

    wm, bm   = linear_params(keys[0], MAIN_DIM, HIDDEN)          # main_embed
    wv, bv   = linear_params(keys[1], VEH_DIM, HIDDEN)           # veh_embed
    wf, bf   = linear_params(keys[2], 2 * HIDDEN + 3, HIDDEN)    # fc_final
    wp, bp   = linear_params(keys[3], HIDDEN, ACTION_DIM)        # policy_head
    wvh, bvh = linear_params(keys[4], HIDDEN, 1)                 # value_head
    params = dict(wm=wm, bm=bm, wv=wv, bv=bv, wf=wf, bf=bf,
                  wp=wp, bp=bp, wvh=wvh, bvh=bvh)
    slab = pack_params(params)

    # --- small batch (single grid step) ---
    x      = jax.random.normal(keys[5], (B, STATE_DIM), dtype=jnp.float32)
    action = jax.random.randint(keys[6], (B,), 0, 3)
    prob   = jax.nn.softmax(jax.random.normal(keys[7], (B, 3), dtype=jnp.float32), axis=1)

    policy, value = ppo_forward(x, action, prob, params, slab)
    jax.block_until_ready((policy, value))

    ref_policy, ref_value = ppo_forward_ref(x, action, prob, params)
    assert policy.shape == (B, ACTION_DIM) and value.shape == (B, 1)
    assert jnp.allclose(policy, ref_policy, atol=2e-3, rtol=2e-3)
    assert jnp.allclose(value, ref_value, atol=2e-3, rtol=2e-3)

    # --- larger batch (still a single grid step; exercises MXU M-dim fill) ---
    B2      = 256
    x2      = jax.random.normal(keys[8], (B2, STATE_DIM), dtype=jnp.float32)
    action2 = jax.random.randint(keys[9], (B2,), 0, 3)
    prob2   = jax.nn.softmax(jax.random.normal(keys[10], (B2, 3), dtype=jnp.float32), axis=1)

    policy2, value2 = ppo_forward(x2, action2, prob2, params, slab)
    jax.block_until_ready((policy2, value2))
    ref_policy2, ref_value2 = ppo_forward_ref(x2, action2, prob2, params)
    assert jnp.allclose(policy2, ref_policy2, atol=2e-3, rtol=2e-3)
    assert jnp.allclose(value2, ref_value2, atol=2e-3, rtol=2e-3)

    print("KERNEL_OK")
</pallas_src>

<mosaic_0001>
module attributes {stable_mosaic.version = 11 : i64} {
  func.func @ppo_attention_kernel(%arg0: i32, %arg1: memref<4x64xf32, #tpu.memory_space<vmem>>, %arg2: memref<128x128xf32, #tpu.memory_space<vmem>>, %arg3: memref<4x4xf32, #tpu.memory_space<vmem>>) attributes {dimension_semantics = [#tpu.dimension_semantics<parallel>], iteration_bounds = array<i64: 1>, scalar_prefetch = 0 : i64, scratch_operands = 0 : i64, tpu.core_type = #tpu.core_type<tc>, window_params = [{transform_indices = @transform_0, window_bounds = array<i64: 4, 64>}, {pipeline_mode = #tpu.pipeline_mode<synchronous>, transform_indices = @transform_1, window_bounds = array<i64: 128, 128>}, {transform_indices = @transform_2, window_bounds = array<i64: 4, 4>}]} {
    %c0 = arith.constant 0 : index
    %c0_0 = arith.constant 0 : index
    %0 = vector.load %arg1[%c0, %c0_0] : memref<4x64xf32, #tpu.memory_space<vmem>>, vector<4x64xf32>
    %1 = vector.extract_strided_slice %0 {offsets = [0, 0], sizes = [4, 42], strides = [1, 1]} : vector<4x64xf32> to vector<4x42xf32>
    %2 = vector.extract_strided_slice %0 {offsets = [0, 47], sizes = [4, 3], strides = [1, 1]} : vector<4x64xf32> to vector<4x3xf32>
    %3 = vector.extract_strided_slice %0 {offsets = [0, 50], sizes = [4, 3], strides = [1, 1]} : vector<4x64xf32> to vector<4x3xf32>
    %4 = arith.subf %3, %2 : vector<4x3xf32>
    %5 = math.absf %4 : vector<4x3xf32>
    %cst = arith.constant dense<0.000000e+00> : vector<4xf32>
    %6 = vector.multi_reduction <add>, %5, %cst [1] : vector<4x3xf32> to vector<4xf32>
    %7 = vector.shape_cast %6 : vector<4xf32> to vector<4x1xf32>
    %cst_1 = arith.constant -2.000000e+00 : f32
    %8 = vector.broadcast %cst_1 : f32 to vector<4x1xf32>
    %9 = arith.mulf %8, %7 : vector<4x1xf32>
    %10 = math.exp %9 : vector<4x1xf32>
    %cst_2 = arith.constant 1.000000e+00 : f32
    %11 = vector.broadcast %cst_2 : f32 to vector<4x1xf32>
    %12 = arith.addf %11, %10 : vector<4x1xf32>
    %cst_3 = arith.constant 1.000000e+00 : f32
    %13 = vector.broadcast %cst_3 : f32 to vector<4x1xf32>
    %14 = arith.divf %13, %12 : vector<4x1xf32>
    %c112 = arith.constant 112 : index
    %c0_4 = arith.constant 0 : index
    %15 = vector.load %arg2[%c112, %c0_4] : memref<128x128xf32, #tpu.memory_space<vmem>>, vector<1x42xf32>
    %c64 = arith.constant 64 : index
    %c64_5 = arith.constant 64 : index
    %16 = vector.load %arg2[%c64, %c64_5] : memref<128x128xf32, #tpu.memory_space<vmem>>, vector<42x6xf32>
    %17 = vector.broadcast %15 : vector<1x42xf32> to vector<4x42xf32>
    %18 = arith.addf %1, %17 : vector<4x42xf32>
    %19 = arith.mulf %1, %18 : vector<4x42xf32>
    %cst_6 = arith.constant dense<0.000000e+00> : vector<4x6xf32>
    %20 = tpu.matmul %19, %16, %cst_6 {dimension_numbers = #tpu.dot_dimension_numbers<[1], [0], [0], [1], [0, 0, 1, 1], [], []>} : vector<4x42xf32>, vector<42x6xf32>, vector<4x6xf32> -> vector<4x6xf32>
    %cst_7 = arith.constant 5.000000e+01 : f32
    %21 = vector.broadcast %cst_7 : f32 to vector<4x6xf32>
    %22 = arith.addf %20, %21 : vector<4x6xf32>
    %cst_8 = arith.constant 0.000000e+00 : f32
    %23 = vector.broadcast %cst_8 : f32 to vector<4x6xf32>
    %24 = arith.maximumf %22, %23 : vector<4x6xf32>
    %25 = math.sqrt %24 : vector<4x6xf32>
    %cst_9 = arith.constant 0.000000e+00 : f32
    %26 = vector.broadcast %cst_9 : f32 to vector<4x6xf32>
    %27 = arith.subf %26, %25 : vector<4x6xf32>
    %cst_10 = arith.constant dense<0xFF800000> : vector<4xf32>
    %28 = vector.multi_reduction <maximumf>, %27, %cst_10 [1] : vector<4x6xf32> to vector<4xf32>
    %29 = vector.shape_cast %28 : vector<4xf32> to vector<4x1xf32>
    %30 = vector.broadcast %29 : vector<4x1xf32> to vector<4x6xf32>
    %31 = arith.subf %27, %30 : vector<4x6xf32>
    %32 = math.exp %31 : vector<4x6xf32>
    %cst_11 = arith.constant dense<0.000000e+00> : vector<4xf32>
    %33 = vector.multi_reduction <add>, %32, %cst_11 [1] : vector<4x6xf32> to vector<4xf32>
    %34 = vector.shape_cast %33 : vector<4xf32> to vector<4x1xf32>
    %35 = vector.broadcast %34 : vector<4x1xf32> to vector<4x6xf32>
    %36 = arith.divf %32, %35 : vector<4x6xf32>
    %cst_12 = arith.constant 1.000000e+00 : f32
    %37 = vector.broadcast %cst_12 : f32 to vector<4x1xf32>
    %38 = tpu.concatenate %36, %14, %37 in 1 : vector<4x6xf32>, vector<4x1xf32>, vector<4x1xf32> -> vector<4x8xf32>
    %c64_13 = arith.constant 64 : index
    %c0_14 = arith.constant 0 : index
    %39 = vector.load %arg2[%c64_13, %c0_14] : memref<128x128xf32, #tpu.memory_space<vmem>>, vector<8x64xf32>
    %cst_15 = arith.constant dense<0.000000e+00> : vector<4x64xf32>
    %40 = tpu.matmul %38, %39, %cst_15 {dimension_numbers = #tpu.dot_dimension_numbers<[1], [0], [0], [1], [0, 0, 1, 1], [], []>} : vector<4x8xf32>, vector<8x64xf32>, vector<4x64xf32> -> vector<4x64xf32>
    %41 = arith.mulf %0, %40 : vector<4x64xf32>
    %c0_16 = arith.constant 0 : index
    %c0_17 = arith.constant 0 : index
    %42 = vector.load %arg2[%c0_16, %c0_17] : memref<128x128xf32, #tpu.memory_space<vmem>>, vector<64x96xf32>
    %cst_18 = arith.constant dense<0.000000e+00> : vector<4x96xf32>
    %43 = tpu.matmul %41, %42, %cst_18 {dimension_numbers = #tpu.dot_dimension_numbers<[1], [0], [0], [1], [0, 0, 1, 1], [], []>} : vector<4x64xf32>, vector<64x96xf32>, vector<4x96xf32> -> vector<4x96xf32>
    %c0_19 = arith.constant 0 : index
    %c96 = arith.constant 96 : index
    %44 = vector.load %arg2[%c0_19, %c96] : memref<128x128xf32, #tpu.memory_space<vmem>>, vector<64x32xf32>
    %c113 = arith.constant 113 : index
    %c0_20 = arith.constant 0 : index
    %45 = vector.load %arg2[%c113, %c0_20] : memref<128x128xf32, #tpu.memory_space<vmem>>, vector<1x32xf32>
    %46 = vector.extract_strided_slice %43 {offsets = [0, 0], sizes = [4, 64], strides = [1, 1]} : vector<4x96xf32> to vector<4x64xf32>
    %cst_21 = arith.constant dense<0.000000e+00> : vector<4x32xf32>
    %47 = tpu.matmul %46, %44, %cst_21 {dimension_numbers = #tpu.dot_dimension_numbers<[1], [0], [0], [1], [0, 0, 1, 1], [], []>} : vector<4x64xf32>, vector<64x32xf32>, vector<4x32xf32> -> vector<4x32xf32>
    %48 = vector.extract_strided_slice %43 {offsets = [0, 64], sizes = [4, 32], strides = [1, 1]} : vector<4x96xf32> to vector<4x32xf32>
    %49 = arith.addf %47, %48 : vector<4x32xf32>
    %50 = vector.broadcast %45 : vector<1x32xf32> to vector<4x32xf32>
    %51 = arith.addf %49, %50 : vector<4x32xf32>
    %cst_22 = arith.constant 0.000000e+00 : f32
    %52 = vector.broadcast %cst_22 : f32 to vector<4x32xf32>
    %53 = arith.maximumf %51, %52 : vector<4x32xf32>
    %c72 = arith.constant 72 : index
    %c0_23 = arith.constant 0 : index
    %54 = vector.load %arg2[%c72, %c0_23] : memref<128x128xf32, #tpu.memory_space<vmem>>, vector<32x4xf32>
    %c114 = arith.constant 114 : index
    %c0_24 = arith.constant 0 : index
    %55 = vector.load %arg2[%c114, %c0_24] : memref<128x128xf32, #tpu.memory_space<vmem>>, vector<1x4xf32>
    %cst_25 = arith.constant dense<0.000000e+00> : vector<4x4xf32>
    %56 = tpu.matmul %53, %54, %cst_25 {dimension_numbers = #tpu.dot_dimension_numbers<[1], [0], [0], [1], [0, 0, 1, 1], [], []>} : vector<4x32xf32>, vector<32x4xf32>, vector<4x4xf32> -> vector<4x4xf32>
    %57 = vector.broadcast %55 : vector<1x4xf32> to vector<4x4xf32>
    %58 = arith.addf %56, %57 : vector<4x4xf32>
    %c0_26 = arith.constant 0 : index
    %c0_27 = arith.constant 0 : index
    %59 = vector.load %arg3[%c0_26, %c0_27] : memref<4x4xf32, #tpu.memory_space<vmem>>, vector<4x4xf32>
    tpu.vector_store %arg3[%c0_26, %c0_27], %58 {strides = array<i32>} : memref<4x4xf32, #tpu.memory_space<vmem>>, vector<4x4xf32>,
    return
  }
  func.func @transform_0(%arg0: i32) -> (i32, i32) {
    %c0_i32 = arith.constant 0 : i32
    %c0_i32_0 = arith.constant 0 : i32
    return %arg0, %c0_i32 : i32, i32
  }
  func.func @transform_1(%arg0: i32) -> (i32, i32) {
    %c0_i32 = arith.constant 0 : i32
    %c0_i32_0 = arith.constant 0 : i32
    %c0_i32_1 = arith.constant 0 : i32
    return %c0_i32, %c0_i32_0 : i32, i32
  }
  func.func @transform_2(%arg0: i32) -> (i32, i32) {
    %c0_i32 = arith.constant 0 : i32
    %c0_i32_0 = arith.constant 0 : i32
    return %arg0, %c0_i32 : i32, i32
  }
}

</mosaic_0001>

<llo_original>
// kernel: tpu_custom_call.1
$region0: #{tpu_custom_call.1}
  #allocation0 [shape = 'u32[]', space=smem, size = 0x4, offset = 0x4, fixed_abs, tag = 'smem constant byte address 0x4 - core index']
  #allocation1 [shape = 'u32[72,128]{1,0:T(1,128)}', space=vmem, size = 0x9000, scoped, tag = 'internal scratch']
  %s0 = inlined_call_operand.hbm [shape: f32[4,64], index: 0, kind: input, shape index: {}]
  %s1 = inlined_call_operand.hbm [shape: f32[128,128], index: 1, kind: input, shape index: {}]
  %s2 = inlined_call_operand.hbm [shape: f32[4,4], index: 2, kind: output, shape index: {}]
  %s3 = sld [smem:[#allocation0]]
  $region26: #{tpu_custom_call.1} parent=0
    _
  %s5 = ssub.s32 1, %s3
  %s6 = scalar_select 0, %s5, %s3
  $region1: #{tpu_custom_call.1} parent=0
    #allocation2 [shape = 'u8[2048]{0}', space=vmem, size = 0x800, scoped, tag = 'input window, operand 0, single buffered']
    #allocation3 [shape = 's32[1]{0}', space=sflag, size = 0x4, scoped, tag = 'scoped memory for tpu_custom_call.1']
    #allocation4 [shape = 's32[1]{0}', space=sflag, size = 0x4, scoped, tag = 'scoped memory for tpu_custom_call.1']
    #allocation5 [shape = 'u8[65536]{0}', space=vmem, size = 0x10000, scoped, tag = 'input window, operand 1, single buffered']
    #allocation6 [shape = 's32[1]{0}', space=sflag, size = 0x4, scoped, tag = 'scoped memory for tpu_custom_call.1']
    #allocation7 [shape = 'u8[2048]{0}', space=vmem, size = 0x800, scoped, tag = 'output window, operand 0, single buffered']
    %7 = vsyncpa [#allocation3], 0
    %8 = vsyncpa [#allocation6], 0
    %9 = vsyncpa [#allocation4], 0
    // Predicated region
    $region2: #{tpu_custom_call.1} parent=1 // pred_check
      _
    $region3: #{tpu_custom_call.1} parent=1 // pred_check_branch
      %11 = sbr.rel (0) target = $region5
    $region4: #{tpu_custom_call.1} parent=1 // pred_region
      %13 = vsyncadd [#allocation3], 0
      %s15 = sshll.u32 %s0, 4
      %s16 = int_to_ptr.hbm [resolvable:$true] %s15
      %s17 = sshll.u32 [#allocation2], 4
      %s18 = int_to_ptr.vmem [resolvable:$true] %s17
      %20 = dma.hbm_to_vmem [thread:$0]  %s16, 64, %s18, [#allocation3]
    $region5: #{tpu_custom_call.1} parent=1 // pred_fallthru
      _
    // Predicated region
    $region6: #{tpu_custom_call.1} parent=1 // pred_check
      _
    $region7: #{tpu_custom_call.1} parent=1 // pred_check_branch
      %22 = sbr.rel (0) target = $region9
    $region8: #{tpu_custom_call.1} parent=1 // pred_region
      %24 = vsyncadd [#allocation6], 0
      %s25 = sshll.u32 %s1, 4
      %s26 = int_to_ptr.hbm [resolvable:$true] %s25
      %s27 = sshll.u32 [#allocation5], 4
      %s28 = int_to_ptr.vmem [resolvable:$true] %s27
      %33 = dma.hbm_to_vmem [thread:$0]  %s26, 2048, %s28, [#allocation6], 128, 128, 8
    $region9: #{tpu_custom_call.1} parent=1 // pred_fallthru
      _
    // Predicated region
    $region10: #{tpu_custom_call.1} parent=1 // pred_check
      _
    $region11: #{tpu_custom_call.1} parent=1 // pred_check_branch
      %35 = sbr.rel (0) target = $region13
    $region12: #{tpu_custom_call.1} parent=1 // pred_region
      %37 = dma.done [#allocation3], 64
    $region13: #{tpu_custom_call.1} parent=1 // pred_fallthru
      _
    // Predicated region
    $region14: #{tpu_custom_call.1} parent=1 // pred_check
      _
    $region15: #{tpu_custom_call.1} parent=1 // pred_check_branch
      %39 = sbr.rel (0) target = $region17
    $region16: #{tpu_custom_call.1} parent=1 // pred_region
      %41 = dma.done [#allocation6], 2048
    $region17: #{tpu_custom_call.1} parent=1 // pred_fallthru
      _
    %v42 = vld [vmem:[#allocation2] sm:$0xf]
    %44 = vrot.lane.b32.xlu0 %v42, 3
    %v45 = vpop.permute.xlu0 %44
    %v47 = vsub.f32 %v42, %v45
    %v48 = vand.u32 2147483647, %v47
    %50 = vrot.lane.b32.xlu0 %v48, 78
    %v51 = vpop.permute.xlu0 %50
    %vm53 = vcmask 19456
    %v54 = vsel %vm53, %v51, 0.0
    %55 = vadd.xlane.f32.xlu0 %v54
    %v56 = vpop.xlane.xlu0 %55
    %v57 = vmul.f32 %v56, -2.0
    %v58 = vmul.f32 %v57, 1.442695
    %v59 = vpow.pop %v58
    %v60 = vadd.f32 %v59, 1.0
    %v61 = vrcp.pop %v60
    %v62 = vmul.f32 %v60, %v61
    %v63 = vsub.f32 1.0, %v62
    %v64 = vmul.f32 %v61, %v63
    %v65 = vadd.f32 %v61, %v64
    %vm66 = vweird.f32 %v60
    %vm67 = vweird.f32 %v61
    %vm68 = vmor %vm66, %vm67
    %v69 = vsel %vm68, %v61, %v65
    %v70 = vand.u32 2147483647, %v60
    %vm71 = vcmp.eq.f32.partialorder %v70, 8.507059e+37
    %v72 = vand.u32 %v60, 2147483648
    %v73 = vor.u32 1.1754944e-38, %v72
    %v74 = vsel %vm71, %v73, %v69
    %v75 = vmul.f32 1.0, %v74
    %v76 = vld [vmem:[#allocation5 + $0x70] sm:$0x1]
    %v77 = vld [vmem:[#allocation5 + $0x40] sm:$0xff]
    %v78 = vld [vmem:[#allocation5 + $0x48] sm:$0xff]
    %v79 = vld [vmem:[#allocation5 + $0x50] sm:$0xff]
    %v80 = vld [vmem:[#allocation5 + $0x58] sm:$0xff]
    %v81 = vld [vmem:[#allocation5 + $0x60] sm:$0xff]
    %v82 = vld [vmem:[#allocation5 + $0x68] sm:$0x3]
    %v83 = vperm.slane %v76, 0
    %v84 = vadd.f32 %v42, %v83
    %v85 = vmul.f32 %v42, %v84
    %92 = vrot.lane.b32.xlu0 %v77, 64
    %v93 = vpop.permute.xlu0 %92
    %94 = vrot.lane.b32.xlu0 %v78, 64
    %v95 = vpop.permute.xlu0 %94
    %96 = vrot.lane.b32.xlu0 %v79, 64
    %v97 = vpop.permute.xlu0 %96
    %98 = vrot.lane.b32.xlu0 %v80, 64
    %v99 = vpop.permute.xlu0 %98
    %100 = vrot.lane.b32.xlu0 %v81, 64
    %v101 = vpop.permute.xlu0 %100
    %102 = vrot.lane.b32.xlu0 %v82, 64
    %v103 = vpop.permute.xlu0 %102
    %vm109 = vcmask 343040
    %v111 = vsel %vm109, %v85, 0
    %vm113 = vcmask 1041408
    %v114 = vsel %vm113, %v103, 0
    %116 = vmatpush.msra.mxu0 0.0
    %117 = vmatpush.msra.mxu0 0.0
    %118 = vmatpush.msra.mxu0 0.0
    %119 = vmatpush.msra.mxu0 0.0
    %120 = vmatpush.msra.mxu0 0.0
    %121 = vmatpush.msra.mxu0 0.0
    %122 = vmatpush.msra.mxu0 0.0
    %123 = vmatpush.msra.mxu0 0.0
    %124 = vmatpush.msra.mxu0 0.0
    %125 = vmatpush.msra.mxu0 0.0
    %126 = vmatpush.msra.mxu0 %v114
    %127 = vmatpush.msra.mxu0 %v101
    %128 = vmatpush.msra.mxu0 %v99
    %129 = vmatpush.msra.mxu0 %v97
    %130 = vmatpush.msra.mxu0 %v95
    %131 = vmatpush.msra.mxu0 %v93
    %132 = vmatmul.f32.gmra.mxu0 %v111
    %v133 = vpop.f32.mrf.mxu0
    %v134 = vadd.f32 50.0, %v133
    %135 = vdwg.mxu0
    %v136 = vmax.f32 %v134, 0.0
    %v137 = vrsqrt.pop %v136
    %v138 = vmul.f32 %v137, %v136
    %v139 = vmul.f32 %v138, %v137
    %v140 = vmul.f32 0.5, %v139
    %v141 = vsub.f32 1.5, %v140
    %v142 = vmul.f32 %v137, %v141
    %v143 = vmul.f32 %v136, %v142
    %vm144 = vcmp.eq.f32.partialorder %v136, inf
    %v145 = vsel %vm144, %v136, %v143
    %vm146 = vcmp.eq.f32.partialorder %v136, 0.0
    %v147 = vand.u32 %v136, 2147483648
    %v148 = vsel %vm146, %v147, %v145
    %v149 = vsub.f32 0.0, %v148
    %vm150 = vcmask 44032
    %v151 = vsel %vm150, %v149, -inf
    %152 = vmax.xlane.f32.xlu0 %v151
    %v153 = vpop.xlane.xlu0 %152
    %v154 = vsub.f32 %v149, %v153
    %v155 = vmul.f32 %v154, 1.442695
    %v156 = vpow.pop %v155
    %v157 = vsel %vm150, %v156, 0.0
    %158 = vadd.xlane.f32.xlu0 %v157
    %v159 = vpop.xlane.xlu0 %158
    %v160 = vrcp.pop %v159
    %v161 = vmul.f32 %v159, %v160
    %v162 = vsub.f32 1.0, %v161
    %v163 = vmul.f32 %v160, %v162
    %v164 = vadd.f32 %v160, %v163
    %vm165 = vweird.f32 %v159
    %vm166 = vweird.f32 %v160
    %vm167 = vmor %vm165, %vm166
    %v168 = vsel %vm167, %v160, %v164
    %v169 = vand.u32 2147483647, %v159
    %vm170 = vcmp.eq.f32.partialorder %v169, 8.507059e+37
    %v171 = vand.u32 %v159, 2147483648
    %v172 = vor.u32 1.1754944e-38, %v171
    %v173 = vsel %vm170, %v172, %v168
    %v174 = vmul.f32 %v156, %v173
    %vm175 = vcmask 48128
    %v176 = vsel %vm175, %v174, %v75
    %vm177 = vcmask 56320
    %v178 = vsel %vm177, %v176, 1.0
    %v179 = vld [vmem:[#allocation5 + $0x40] sm:$0xff]
    %vm180 = vcmask 64512
    %v182 = vsel %vm180, %v178, 0
    %184 = vmatpush.msra.mxu0 0.0
    %185 = vmatpush.msra.mxu0 0.0
    %186 = vmatpush.msra.mxu0 0.0
    %187 = vmatpush.msra.mxu0 0.0
    %188 = vmatpush.msra.mxu0 0.0
    %189 = vmatpush.msra.mxu0 0.0
    %190 = vmatpush.msra.mxu0 0.0
    %191 = vmatpush.msra.mxu0 0.0
    %192 = vmatpush.msra.mxu0 0.0
    %193 = vmatpush.msra.mxu0 0.0
    %194 = vmatpush.msra.mxu0 0.0
    %195 = vmatpush.msra.mxu0 0.0
    %196 = vmatpush.msra.mxu0 0.0
    %197 = vmatpush.msra.mxu0 0.0
    %198 = vmatpush.msra.mxu0 0.0
    %199 = vmatpush.msra.mxu0 %v179
    %200 = vmatmul.f32.gmra.mxu0 %v182
    %v201 = vpop.f32.mrf.mxu0
    %v202 = vadd.f32 0.0, %v201
    %203 = vdwg.mxu0
    %v204 = vmul.f32 %v42, %v202
    %v205 = vld [vmem:[#allocation5] sm:$0xff]
    %v206 = vld [vmem:[#allocation5 + $0x8] sm:$0xff]
    %v207 = vld [vmem:[#allocation5 + $0x10] sm:$0xff]
    %v208 = vld [vmem:[#allocation5 + $0x18] sm:$0xff]
    %v209 = vld [vmem:[#allocation5 + $0x20] sm:$0xff]
    %v210 = vld [vmem:[#allocation5 + $0x28] sm:$0xff]
    %v211 = vld [vmem:[#allocation5 + $0x30] sm:$0xff]
    %v212 = vld [vmem:[#allocation5 + $0x38] sm:$0xff]
    %vm213 = vcmask 523264
    %v215 = vsel %vm213, %v204, 0
    %217 = vmatpush.msra.mxu0 0.0
    %218 = vmatpush.msra.mxu0 0.0
    %219 = vmatpush.msra.mxu0 0.0
    %220 = vmatpush.msra.mxu0 0.0
    %221 = vmatpush.msra.mxu0 0.0
    %222 = vmatpush.msra.mxu0 0.0
    %223 = vmatpush.msra.mxu0 0.0
    %224 = vmatpush.msra.mxu0 0.0
    %225 = vmatpush.msra.mxu0 %v212
    %226 = vmatpush.msra.mxu0 %v211
    %227 = vmatpush.msra.mxu0 %v210
    %228 = vmatpush.msra.mxu0 %v209
    %229 = vmatpush.msra.mxu0 %v208
    %230 = vmatpush.msra.mxu0 %v207
    %231 = vmatpush.msra.mxu0 %v206
    %232 = vmatpush.msra.mxu0 %v205
    %233 = vmatmul.f32.gmra.mxu0 %v215
    %v234 = vpop.f32.mrf.mxu0
    %v235 = vadd.f32 0.0, %v234
    %236 = vdwg.mxu0
    %v237 = vld [vmem:[#allocation5 + $0x71] sm:$0x1]
    %246 = vrot.lane.b32.xlu0 %v205, 32
    %v247 = vpop.permute.xlu0 %246
    %248 = vrot.lane.b32.xlu0 %v206, 32
    %v249 = vpop.permute.xlu0 %248
    %250 = vrot.lane.b32.xlu0 %v207, 32
    %v251 = vpop.permute.xlu0 %250
    %252 = vrot.lane.b32.xlu0 %v208, 32
    %v253 = vpop.permute.xlu0 %252
    %254 = vrot.lane.b32.xlu0 %v209, 32
    %v255 = vpop.permute.xlu0 %254
    %256 = vrot.lane.b32.xlu0 %v210, 32
    %v257 = vpop.permute.xlu0 %256
    %258 = vrot.lane.b32.xlu0 %v211, 32
    %v259 = vpop.permute.xlu0 %258
    %260 = vrot.lane.b32.xlu0 %v212, 32
    %v261 = vpop.permute.xlu0 %260
    %271 = vrot.lane.b32.xlu0 %v235, 64
    %v272 = vpop.permute.xlu0 %271
    %v274 = vsel %vm213, %v235, 0
    %276 = vmatpush.msra.mxu0 0.0
    %277 = vmatpush.msra.mxu0 0.0
    %278 = vmatpush.msra.mxu0 0.0
    %279 = vmatpush.msra.mxu0 0.0
    %280 = vmatpush.msra.mxu0 0.0
    %281 = vmatpush.msra.mxu0 0.0
    %282 = vmatpush.msra.mxu0 0.0
    %283 = vmatpush.msra.mxu0 0.0
    %284 = vmatpush.msra.mxu0 %v261
    %285 = vmatpush.msra.mxu0 %v259
    %286 = vmatpush.msra.mxu0 %v257
    %287 = vmatpush.msra.mxu0 %v255
    %288 = vmatpush.msra.mxu0 %v253
    %289 = vmatpush.msra.mxu0 %v251
    %290 = vmatpush.msra.mxu0 %v249
    %291 = vmatpush.msra.mxu0 %v247
    %292 = vmatmul.f32.gmra.mxu0 %v274
    %v293 = vpop.f32.mrf.mxu0
    %v294 = vadd.f32 %v272, %v293
    %295 = vdwg.mxu0
    %v296 = vperm.slane %v237, 0
    %v297 = vadd.f32 %v294, %v296
    %v298 = vmax.f32 %v297, 0.0
    %v299 = vld [vmem:[#allocation5 + $0x48] sm:$0xff]
    %v300 = vld [vmem:[#allocation5 + $0x50] sm:$0xff]
    %v301 = vld [vmem:[#allocation5 + $0x58] sm:$0xff]
    %v302 = vld [vmem:[#allocation5 + $0x60] sm:$0xff]
    %v303 = vld [vmem:[#allocation5 + $0x72] sm:$0x1]
    %v304 = vperm.slane %v303, 0
    %vm305 = vcmask 261120
    %v307 = vsel %vm305, %v298, 0
    %309 = vmatpush.msra.mxu0 0.0
    %310 = vmatpush.msra.mxu0 0.0
    %311 = vmatpush.msra.mxu0 0.0
    %312 = vmatpush.msra.mxu0 0.0
    %313 = vmatpush.msra.mxu0 0.0
    %314 = vmatpush.msra.mxu0 0.0
    %315 = vmatpush.msra.mxu0 0.0
    %316 = vmatpush.msra.mxu0 0.0
    %317 = vmatpush.msra.mxu0 0.0
    %318 = vmatpush.msra.mxu0 0.0
    %319 = vmatpush.msra.mxu0 0.0
    %320 = vmatpush.msra.mxu0 0.0
    %321 = vmatpush.msra.mxu0 %v302
    %322 = vmatpush.msra.mxu0 %v301
    %323 = vmatpush.msra.mxu0 %v300
    %324 = vmatpush.msra.mxu0 %v299
    %325 = vmatmul.f32.gmra.mxu0 %v307
    %v326 = vpop.f32.mrf.mxu0
    %v327 = vadd.f32 %v304, %v326
    %328 = vdwg.mxu0
    %vm329 = vcmask 27648
    %330 = vst.msk [vmem:[#allocation7] sm:$0xf] %vm329, %v327
    // Predicated region
    $region18: #{tpu_custom_call.1} parent=1 // pred_check
      _
    $region19: #{tpu_custom_call.1} parent=1 // pred_check_branch
      %332 = sbr.rel (0) target = $region21
    $region20: #{tpu_custom_call.1} parent=1 // pred_region
      %334 = vsyncadd [#allocation4], 0
      %s336 = sshll.u32 [#allocation7], 4
      %s337 = int_to_ptr.vmem [resolvable:$true] %s336
      %s338 = sshll.u32 %s2, 4
      %s339 = int_to_ptr.hbm [resolvable:$true] %s338
      %341 = dma.vmem_to_hbm [thread:$0]  %s337, 64, %s339, [#allocation4]
    $region21: #{tpu_custom_call.1} parent=1 // pred_fallthru
      _
    // Predicated region
    $region22: #{tpu_custom_call.1} parent=1 // pred_check
      _
    $region23: #{tpu_custom_call.1} parent=1 // pred_check_branch
      %343 = sbr.rel (0) target = $region25
    $region24: #{tpu_custom_call.1} parent=1 // pred_region
      %345 = dma.done [#allocation4], 64
    $region25: #{tpu_custom_call.1} parent=1 // pred_fallthru
      _
    %346 = vsyncpa [#allocation3], 1
    %347 = vsyncpa [#allocation6], 1
    %348 = vsyncpa [#allocation4], 1

</llo_original>
